<compile_context>
chip_gen: v5e
topology: v5e:2x2
jax: 0.10.0
libtpu: 0.0.40
codegen_flags: <defaults>
</compile_context>

<pallas_src>
import math
from functools import partial

import jax
import jax.numpy as jnp
from jax import lax
from jax.experimental import pallas as pl
from jax.experimental.pallas import tpu as pltpu


# ------------------------------ kernel helpers ------------------------------

def _attend_heads(q_bf, m_ref, kv_ref, ctx_ref, wo_ref, bo_ref, o_ref, *, h):
    """q_bf: (tq, D) bf16 query projection (1/sqrt(dk) pre-folded into the weights).
    kv_ref: (Sk, 2D) bf16 VMEM scratch, K in lanes [0,D), V in lanes [D,2D).
    ctx_ref: (tq, D) bf16 VMEM scratch for the concatenated head contexts."""
    D = wo_ref.shape[0]
    dk = D // h
    tq = q_bf.shape[0]
    Sk = kv_ref.shape[0]

    # masked_fill(mask == 0, -1e9) as ONE additive f32 term, broadcast once (hoisted out of
    # the unrolled head loop; JAX does not CSE broadcast_in_dim).
    mask_add = jnp.where(m_ref[...] == 0, jnp.float32(-1e9), jnp.float32(0.0))
    mask_add = jnp.broadcast_to(mask_add, (tq, Sk))

    kv = kv_ref[...]                                            # (Sk, 2D) bf16, loaded once
    for i in range(h):                                          # static unroll over heads
        sl = slice(i * dk, (i + 1) * dk)
        qh = q_bf[:, sl]                                        # (tq, dk) bf16
        kh = kv[:, sl]                                          # (Sk, dk) bf16
        vh = kv[:, D + i * dk: D + (i + 1) * dk]                # (Sk, dk) bf16
        # scores = q @ k^T (scale already folded into q); contract dk directly (no transpose)
        s = lax.dot_general(qh, kh, (((1,), (1,)), ((), ())),
                            preferred_element_type=jnp.float32) + mask_add
        s = s - jnp.max(s, axis=-1, keepdims=True)              # stable softmax, f32
        e = jnp.exp(s)
        p = e * pl.reciprocal(jnp.sum(e, axis=-1, keepdims=True), approx=True)
        ctx_ref[:, sl] = jnp.dot(p.astype(jnp.bfloat16), vh,
                                 preferred_element_type=jnp.float32).astype(jnp.bfloat16)

    # Single full-contraction-depth output projection (tq, D) x (D, D); no head concat.
    out = jnp.dot(ctx_ref[...], wo_ref[...], preferred_element_type=jnp.float32) + bo_ref[...]
    o_ref[...] = out.astype(o_ref.dtype)


# ------------------------------ kernel bodies -------------------------------

def _mha_self_kernel(x_ref, m_ref, wq_ref, bq_ref, wkv_ref, bkv_ref, wo_ref, bo_ref,
                     o_ref, kv_ref, ctx_ref, *, h, tq):
    """Self-attention; x block (S, D) is resident per batch element, query tile sliced in-kernel."""
    qi = pl.program_id(1)

    @pl.when(qi == 0)
    def _():
        # K/V projected ONCE per batch element with a single wide (S,D)x(D,2D) MXU matmul,
        # cached in VMEM scratch for all query tiles of this batch element.
        kv = jnp.dot(x_ref[...].astype(jnp.bfloat16), wkv_ref[...],
                     preferred_element_type=jnp.float32) + bkv_ref[...]
        kv_ref[...] = kv.astype(jnp.bfloat16)

    row0 = pl.multiple_of(qi * tq, tq)
    xq = x_ref[pl.ds(row0, tq), :].astype(jnp.bfloat16)          # (tq, D)
    q = jnp.dot(xq, wq_ref[...], preferred_element_type=jnp.float32) + bq_ref[...]
    _attend_heads(q.astype(jnp.bfloat16), m_ref, kv_ref, ctx_ref, wo_ref, bo_ref, o_ref, h=h)


def _mha_cross_kernel(q_ref, mem_ref, m_ref, wq_ref, bq_ref, wkv_ref, bkv_ref, wo_ref, bo_ref,
                      o_ref, kv_ref, ctx_ref, *, h):
    """Cross attention with key == value == memory (memory DMA'd once, one KV matmul)."""
    @pl.when(pl.program_id(1) == 0)
    def _():
        kv = jnp.dot(mem_ref[...].astype(jnp.bfloat16), wkv_ref[...],
                     preferred_element_type=jnp.float32) + bkv_ref[...]
        kv_ref[...] = kv.astype(jnp.bfloat16)

    q = jnp.dot(q_ref[...].astype(jnp.bfloat16), wq_ref[...],
                preferred_element_type=jnp.float32) + bq_ref[...]
    _attend_heads(q.astype(jnp.bfloat16), m_ref, kv_ref, ctx_ref, wo_ref, bo_ref, o_ref, h=h)


def _mha_general_kernel(q_ref, k_ref, v_ref, m_ref, wq_ref, bq_ref, wkv_ref, bkv_ref,
                        wo_ref, bo_ref, o_ref, kv_ref, ctx_ref, *, h):
    """General attention: distinct query / key / value inputs."""
    D = wo_ref.shape[0]

    @pl.when(pl.program_id(1) == 0)
    def _():
        wkv = wkv_ref[...]
        bkv = bkv_ref[...]
        k2 = jnp.dot(k_ref[...].astype(jnp.bfloat16), wkv[:, :D],
                     preferred_element_type=jnp.float32) + bkv[:, :D]
        v2 = jnp.dot(v_ref[...].astype(jnp.bfloat16), wkv[:, D:],
                     preferred_element_type=jnp.float32) + bkv[:, D:]
        kv_ref[:, :D] = k2.astype(jnp.bfloat16)
        kv_ref[:, D:] = v2.astype(jnp.bfloat16)

    q = jnp.dot(q_ref[...].astype(jnp.bfloat16), wq_ref[...],
                preferred_element_type=jnp.float32) + bq_ref[...]
    _attend_heads(q.astype(jnp.bfloat16), m_ref, kv_ref, ctx_ref, wo_ref, bo_ref, o_ref, h=h)


# -------------------------------- wrappers -----------------------------------

def _prep_mask(mask, B, Sk):
    """Normalize the mask to (B, Mq, Sk) int32, Mq in {1, Sq}, without query broadcast in HBM."""
    if mask is None:
        return jnp.ones((B, 1, Sk), jnp.int32)
    mask = jnp.asarray(mask).astype(jnp.int32)
    if mask.ndim == 2:                       # e.g. subsequent_mask without batch dim
        mask = mask[None]
    if mask.shape[0] == 1 and B > 1:
        mask = jnp.broadcast_to(mask, (B,) + mask.shape[1:])
    return mask


def _pick_tq(Sq, target):
    """Largest multiple of 8 <= target that divides Sq; full Sq if none (or Sq small)."""
    if Sq <= target:
        return Sq
    t = (target // 8) * 8
    while t >= 8:
        if Sq % t == 0:
            return t
        t -= 8
    return Sq


def _mask_spec(Mq, Sk, tq):
    if Mq == 1:
        return pl.BlockSpec((None, 1, Sk), lambda b, q: (b, 0, 0))
    return pl.BlockSpec((None, tq, Sk), lambda b, q: (b, q, 0))


def _weight_specs(D):
    c = lambda b, q: (0, 0)                  # constant index -> weights stay VMEM resident
    return [pl.BlockSpec((D, D), c),         # wq  (bf16, 1/sqrt(dk) folded in)
            pl.BlockSpec((1, D), c),         # bq  (f32, folded)
            pl.BlockSpec((D, 2 * D), c),     # wkv (bf16)
            pl.BlockSpec((1, 2 * D), c),     # bkv (f32)
            pl.BlockSpec((D, D), c),         # wo  (bf16)
            pl.BlockSpec((1, D), c)]         # bo  (f32)


def _weight_args(params):
    return (params["wq"], params["bq"], params["wkv"], params["bkv"],
            params["wo"], params["bo"])


_SEMANTICS = pltpu.CompilerParams(dimension_semantics=("parallel", "arbitrary"))


def multi_header_self_attention(params, x, mask=None, *, h, q_tile=256, out_dtype=None):
    """MultiHeaderAttention.forward(x, x, x, mask): fused self-attention, x read from HBM once."""
    B, S, D = x.shape
    assert D % h == 0
    tq = _pick_tq(S, q_tile)
    mask = _prep_mask(mask, B, S)
    return pl.pallas_call(
        partial(_mha_self_kernel, h=h, tq=tq),
        out_shape=jax.ShapeDtypeStruct((B, S, D), out_dtype or x.dtype),
        grid=(B, S // tq),
        in_specs=[pl.BlockSpec((None, S, D), lambda b, q: (b, 0, 0)),
                  _mask_spec(mask.shape[1], S, tq)] + _weight_specs(D),
        out_specs=pl.BlockSpec((None, tq, D), lambda b, q: (b, q, 0)),
        scratch_shapes=[pltpu.VMEM((S, 2 * D), jnp.bfloat16),     # cached K|V projections
                        pltpu.VMEM((tq, D), jnp.bfloat16)],       # head-context slab
        compiler_params=_SEMANTICS,
    )(x, mask, *_weight_args(params))


def multi_header_cross_attention(params, query, memory, mask=None, *, h, q_tile=256,
                                 out_dtype=None):
    """MultiHeaderAttention.forward(query, memory, memory, mask): key == value path."""
    B, Sq, D = query.shape
    Sk = memory.shape[1]
    assert D % h == 0 and memory.shape[-1] == D
    tq = _pick_tq(Sq, q_tile)
    mask = _prep_mask(mask, B, Sk)
    return pl.pallas_call(
        partial(_mha_cross_kernel, h=h),
        out_shape=jax.ShapeDtypeStruct((B, Sq, D), out_dtype or query.dtype),
        grid=(B, Sq // tq),
        in_specs=[pl.BlockSpec((None, tq, D), lambda b, q: (b, q, 0)),
                  pl.BlockSpec((None, Sk, D), lambda b, q: (b, 0, 0)),
                  _mask_spec(mask.shape[1], Sk, tq)] + _weight_specs(D),
        out_specs=pl.BlockSpec((None, tq, D), lambda b, q: (b, q, 0)),
        scratch_shapes=[pltpu.VMEM((Sk, 2 * D), jnp.bfloat16),
                        pltpu.VMEM((tq, D), jnp.bfloat16)],
        compiler_params=_SEMANTICS,
    )(query, memory, mask, *_weight_args(params))


def multi_header_attention(params, query, key, value, mask=None, *, h, q_tile=256,
                           out_dtype=None):
    """Mirrors MultiHeaderAttention.forward(query, key, value, mask) (general path)."""
    if key is value:                                   # trace-time dispatch to fused paths
        if query is key:
            return multi_header_self_attention(params, query, mask, h=h, q_tile=q_tile,
                                               out_dtype=out_dtype)
        return multi_header_cross_attention(params, query, key, mask, h=h, q_tile=q_tile,
                                            out_dtype=out_dtype)
    B, Sq, D = query.shape
    Sk = key.shape[1]
    assert D % h == 0 and value.shape[1] == Sk
    tq = _pick_tq(Sq, q_tile)
    mask = _prep_mask(mask, B, Sk)
    return pl.pallas_call(
        partial(_mha_general_kernel, h=h),
        out_shape=jax.ShapeDtypeStruct((B, Sq, D), out_dtype or query.dtype),
        grid=(B, Sq // tq),
        in_specs=[pl.BlockSpec((None, tq, D), lambda b, q: (b, q, 0)),
                  pl.BlockSpec((None, Sk, D), lambda b, q: (b, 0, 0)),
                  pl.BlockSpec((None, Sk, D), lambda b, q: (b, 0, 0)),
                  _mask_spec(mask.shape[1], Sk, tq)] + _weight_specs(D),
        out_specs=pl.BlockSpec((None, tq, D), lambda b, q: (b, q, 0)),
        scratch_shapes=[pltpu.VMEM((Sk, 2 * D), jnp.bfloat16),
                        pltpu.VMEM((tq, D), jnp.bfloat16)],
        compiler_params=_SEMANTICS,
    )(query, key, value, mask, *_weight_args(params))


# --------------------------------- params ------------------------------------

def init_mha_params(key, h, d_model):
    """Mirror nn.Linear init (uniform +-1/sqrt(fan_in)); store W^T so x @ w == x @ W.T.
    The 1/sqrt(d_k) attention scale is folded into the Q projection weight AND bias."""
    dk = d_model // h
    scale = 1.0 / math.sqrt(dk)

    def linear_init(k, fan_in, fan_out):
        kw, kb = jax.random.split(k)
        bound = 1.0 / math.sqrt(fan_in)
        w = jax.random.uniform(kw, (fan_in, fan_out), jnp.float32, -bound, bound)
        b = jax.random.uniform(kb, (fan_out,), jnp.float32, -bound, bound)
        return w, b

    kq, kk, kv, ko = jax.random.split(key, 4)
    wq, bq = linear_init(kq, d_model, d_model)
    wk, bk = linear_init(kk, d_model, d_model)
    wv, bv = linear_init(kv, d_model, d_model)
    wo, bo = linear_init(ko, d_model, d_model)
    return dict(
        wq=(wq * scale).astype(jnp.bfloat16),                        # (D, D)  bf16, scaled
        bq=(bq * scale)[None, :],                                    # (1, D)  f32,  scaled
        wkv=jnp.concatenate([wk, wv], axis=1).astype(jnp.bfloat16),  # (D, 2D) bf16
        bkv=jnp.concatenate([bk, bv])[None, :],                      # (1, 2D) f32
        wo=wo.astype(jnp.bfloat16),                                  # (D, D)  bf16
        bo=bo[None, :],                                              # (1, D)  f32
    )


# ------------------------------ pure-JAX reference ---------------------------

def _reference(params, query, key, value, mask, h):
    """f32 reference using the same (bf16, scale-folded) params; equals the PyTorch forward."""
    B, Sq, D = query.shape
    Sk = key.shape[1]
    dk = D // h
    wq = params["wq"].astype(jnp.float32)
    wkv = params["wkv"].astype(jnp.float32)
    wo = params["wo"].astype(jnp.float32)
    bq, bkv, bo = params["bq"][0], params["bkv"][0], params["bo"][0]
    q = query @ wq + bq                      # 1/sqrt(dk) already folded into wq/bq
    k = key @ wkv[:, :D] + bkv[:D]
    v = value @ wkv[:, D:] + bkv[D:]
    qh = q.reshape(B, Sq, h, dk).transpose(0, 2, 1, 3)
    kh = k.reshape(B, Sk, h, dk).transpose(0, 2, 1, 3)
    vh = v.reshape(B, Sk, h, dk).transpose(0, 2, 1, 3)
    s = jnp.einsum("bhqd,bhkd->bhqk", qh, kh)
    m = _prep_mask(mask, B, Sk)[:, None, :, :]
    s = jnp.where(m == 0, -1e9, s)
    p = jax.nn.softmax(s, axis=-1)
    ctx = jnp.einsum("bhqk,bhkd->bhqd", p, vh).transpose(0, 2, 1, 3).reshape(B, Sq, D)
    return ctx @ wo + bo


# ----------------------------------- main -------------------------------------

if __name__ == "__main__":
    B, S, D_MODEL, H = 2, 8, 32, 4

    root = jax.random.PRNGKey(0)
    k_params, k_x, k_mem, k_x2 = jax.random.split(root, 4)
    params = init_mha_params(k_params, H, D_MODEL)

    x = jax.random.normal(k_x, (B, S, D_MODEL), jnp.float32)
    memory = jax.random.normal(k_mem, (B, S, D_MODEL), jnp.float32)
    # pad mask (B, 1, Sk): last two positions of batch 1 are padding (exercises masked_fill)
    mask = jnp.ones((B, 1, S), jnp.int32).at[1, 0, S - 2:].set(0)

    self_fn = jax.jit(partial(multi_header_self_attention, h=H))
    cross_fn = jax.jit(partial(multi_header_cross_attention, h=H))
    gen_fn = jax.jit(partial(multi_header_attention, h=H))

    out_self = jax.block_until_ready(self_fn(params, x, mask))              # forward(x, x, x)
    out_cross = jax.block_until_ready(cross_fn(params, x, memory, mask))    # forward(x, m, m)
    out_gen = jax.block_until_ready(gen_fn(params, x, memory, memory, mask))

    ref_self = _reference(params, x, x, x, mask, H)
    ref_cross = _reference(params, x, memory, memory, mask, H)
    assert out_self.shape == (B, S, D_MODEL) and out_cross.shape == (B, S, D_MODEL)
    assert bool(jnp.allclose(out_self, ref_self, atol=5e-2, rtol=5e-2))
    assert bool(jnp.allclose(out_cross, ref_cross, atol=5e-2, rtol=5e-2))
    assert bool(jnp.allclose(out_gen, ref_cross, atol=5e-2, rtol=5e-2))

    # Second case: longer sequence with causal mask -> exercises query tiling (nq > 1),
    # the per-batch KV scratch reuse across query tiles, and the query-indexed mask path.
    S2, TQ2 = 64, 32
    x2 = jax.random.normal(k_x2, (B, S2, D_MODEL), jnp.float32)
    causal = jnp.tril(jnp.ones((S2, S2), jnp.int32))[None]                  # (1, S2, S2)
    self_fn2 = jax.jit(partial(multi_header_self_attention, h=H, q_tile=TQ2))
    out2 = jax.block_until_ready(self_fn2(params, x2, causal))
    ref2 = _reference(params, x2, x2, x2, causal, H)
    assert out2.shape == (B, S2, D_MODEL)
    assert bool(jnp.allclose(out2, ref2, atol=5e-2, rtol=5e-2))

    print("KERNEL_OK")
</pallas_src>

<mosaic_0001>
module attributes {stable_mosaic.version = 11 : i64} {
  func.func @_mha_self_kernel(%arg0: i32, %arg1: i32, %arg2: memref<1x8x32xf32, #tpu.memory_space<vmem>>, %arg3: memref<1x1x8xi32, #tpu.memory_space<vmem>>, %arg4: memref<32x32xbf16, #tpu.memory_space<vmem>>, %arg5: memref<1x32xf32, #tpu.memory_space<vmem>>, %arg6: memref<32x64xbf16, #tpu.memory_space<vmem>>, %arg7: memref<1x64xf32, #tpu.memory_space<vmem>>, %arg8: memref<32x32xbf16, #tpu.memory_space<vmem>>, %arg9: memref<1x32xf32, #tpu.memory_space<vmem>>, %arg10: memref<1x8x32xf32, #tpu.memory_space<vmem>>, %arg11: memref<8x64xbf16, #tpu.memory_space<vmem>>, %arg12: memref<8x32xbf16, #tpu.memory_space<vmem>>) attributes {dimension_semantics = [#tpu.dimension_semantics<parallel>, #tpu.dimension_semantics<arbitrary>], iteration_bounds = array<i64: 2, 1>, scalar_prefetch = 0 : i64, scratch_operands = 2 : i64, tpu.core_type = #tpu.core_type<tc>, window_params = [{transform_indices = @transform_0, window_bounds = array<i64: 1, 8, 32>}, {transform_indices = @transform_1, window_bounds = array<i64: 1, 1, 8>}, {pipeline_mode = #tpu.pipeline_mode<synchronous>, transform_indices = @transform_2, window_bounds = array<i64: 32, 32>}, {pipeline_mode = #tpu.pipeline_mode<synchronous>, transform_indices = @transform_3, window_bounds = array<i64: 1, 32>}, {pipeline_mode = #tpu.pipeline_mode<synchronous>, transform_indices = @transform_4, window_bounds = array<i64: 32, 64>}, {pipeline_mode = #tpu.pipeline_mode<synchronous>, transform_indices = @transform_5, window_bounds = array<i64: 1, 64>}, {pipeline_mode = #tpu.pipeline_mode<synchronous>, transform_indices = @transform_6, window_bounds = array<i64: 32, 32>}, {pipeline_mode = #tpu.pipeline_mode<synchronous>, transform_indices = @transform_7, window_bounds = array<i64: 1, 32>}, {transform_indices = @transform_8, window_bounds = array<i64: 1, 8, 32>}]} {
    %c0_i32 = arith.constant 0 : i32
    %0 = arith.cmpi eq, %arg1, %c0_i32 : i32
    %1 = arith.extui %0 : i1 to i32
    %c0_i32_0 = arith.constant 0 : i32
    %2 = arith.cmpi ne, %1, %c0_i32_0 : i32
    scf.if %2 {
      %c0_45 = arith.constant 0 : index
      %c0_46 = arith.constant 0 : index
      %c0_47 = arith.constant 0 : index
      %110 = vector.load %arg2[%c0_45, %c0_46, %c0_47] : memref<1x8x32xf32, #tpu.memory_space<vmem>>, vector<1x8x32xf32>
      %111 = vector.shape_cast %110 : vector<1x8x32xf32> to vector<8x32xf32>
      %112 = arith.truncf %111 : vector<8x32xf32> to vector<8x32xbf16>
      %c0_48 = arith.constant 0 : index
      %c0_49 = arith.constant 0 : index
      %113 = vector.load %arg6[%c0_48, %c0_49] : memref<32x64xbf16, #tpu.memory_space<vmem>>, vector<32x64xbf16>
      %cst_50 = arith.constant dense<0.000000e+00> : vector<8x64xf32>
      %114 = tpu.matmul %112, %113, %cst_50 {dimension_numbers = #tpu.dot_dimension_numbers<[1], [0], [0], [1], [0, 0, 1, 1], [], []>} : vector<8x32xbf16>, vector<32x64xbf16>, vector<8x64xf32> -> vector<8x64xf32>
      %c0_51 = arith.constant 0 : index
      %c0_52 = arith.constant 0 : index
      %115 = vector.load %arg7[%c0_51, %c0_52] : memref<1x64xf32, #tpu.memory_space<vmem>>, vector<1x64xf32>
      %116 = vector.broadcast %115 : vector<1x64xf32> to vector<8x64xf32>
      %117 = arith.addf %114, %116 : vector<8x64xf32>
      %118 = arith.truncf %117 : vector<8x64xf32> to vector<8x64xbf16>
      %c0_53 = arith.constant 0 : index
      %c0_54 = arith.constant 0 : index
      %119 = vector.load %arg11[%c0_53, %c0_54] : memref<8x64xbf16, #tpu.memory_space<vmem>>, vector<8x64xbf16>
      tpu.vector_store %arg11[%c0_53, %c0_54], %118 {strides = array<i32>} : memref<8x64xbf16, #tpu.memory_space<vmem>>, vector<8x64xbf16>,
    } else {
    }
    %c8_i32 = arith.constant 8 : i32
    %3 = arith.muli %arg1, %c8_i32 : i32
    %4 = tpu.assume_multiple %3, 8 : i32
    %c0 = arith.constant 0 : index
    %5 = arith.index_cast %4 : i32 to index
    %c0_1 = arith.constant 0 : index
    %6 = vector.load %arg2[%c0, %5, %c0_1] : memref<1x8x32xf32, #tpu.memory_space<vmem>>, vector<1x8x32xf32>
    %7 = vector.shape_cast %6 : vector<1x8x32xf32> to vector<8x32xf32>
    %8 = arith.truncf %7 : vector<8x32xf32> to vector<8x32xbf16>
    %c0_2 = arith.constant 0 : index
    %c0_3 = arith.constant 0 : index
    %9 = vector.load %arg4[%c0_2, %c0_3] : memref<32x32xbf16, #tpu.memory_space<vmem>>, vector<32x32xbf16>
    %cst = arith.constant dense<0.000000e+00> : vector<8x32xf32>
    %10 = tpu.matmul %8, %9, %cst {dimension_numbers = #tpu.dot_dimension_numbers<[1], [0], [0], [1], [0, 0, 1, 1], [], []>} : vector<8x32xbf16>, vector<32x32xbf16>, vector<8x32xf32> -> vector<8x32xf32>
    %c0_4 = arith.constant 0 : index
    %c0_5 = arith.constant 0 : index
    %11 = vector.load %arg5[%c0_4, %c0_5] : memref<1x32xf32, #tpu.memory_space<vmem>>, vector<1x32xf32>
    %12 = vector.broadcast %11 : vector<1x32xf32> to vector<8x32xf32>
    %13 = arith.addf %10, %12 : vector<8x32xf32>
    %14 = arith.truncf %13 : vector<8x32xf32> to vector<8x32xbf16>
    %c0_6 = arith.constant 0 : index
    %c0_7 = arith.constant 0 : index
    %c0_8 = arith.constant 0 : index
    %15 = vector.load %arg3[%c0_6, %c0_7, %c0_8] : memref<1x1x8xi32, #tpu.memory_space<vmem>>, vector<1x1x8xi32>
    %16 = vector.shape_cast %15 : vector<1x1x8xi32> to vector<1x8xi32>
    %c0_i32_9 = arith.constant 0 : i32
    %17 = vector.broadcast %c0_i32_9 : i32 to vector<1x8xi32>
    %18 = arith.cmpi eq, %16, %17 : vector<1x8xi32>
    %cst_10 = arith.constant -1.000000e+09 : f32
    %cst_11 = arith.constant 0.000000e+00 : f32
    %19 = vector.broadcast %cst_10 : f32 to vector<1x8xf32>
    %20 = vector.broadcast %cst_11 : f32 to vector<1x8xf32>
    %21 = arith.select %18, %19, %20 : vector<1x8xi1>, vector<1x8xf32>
    %22 = vector.shape_cast %21 : vector<1x8xf32> to vector<1x8xf32>
    %23 = vector.broadcast %22 : vector<1x8xf32> to vector<8x8xf32>
    %c0_12 = arith.constant 0 : index
    %c0_13 = arith.constant 0 : index
    %24 = vector.load %arg11[%c0_12, %c0_13] : memref<8x64xbf16, #tpu.memory_space<vmem>>, vector<8x64xbf16>
    %25 = vector.extract_strided_slice %14 {offsets = [0, 0], sizes = [8, 8], strides = [1, 1]} : vector<8x32xbf16> to vector<8x8xbf16>
    %26 = vector.extract_strided_slice %24 {offsets = [0, 0], sizes = [8, 8], strides = [1, 1]} : vector<8x64xbf16> to vector<8x8xbf16>
    %27 = vector.extract_strided_slice %24 {offsets = [0, 32], sizes = [8, 8], strides = [1, 1]} : vector<8x64xbf16> to vector<8x8xbf16>
    %cst_14 = arith.constant dense<0.000000e+00> : vector<8x8xf32>
    %28 = tpu.matmul %25, %26, %cst_14 {dimension_numbers = #tpu.dot_dimension_numbers<[1], [1], [0], [0], [0, 0, 1, 0], [], []>} : vector<8x8xbf16>, vector<8x8xbf16>, vector<8x8xf32> -> vector<8x8xf32>
    %29 = arith.addf %28, %23 : vector<8x8xf32>
    %cst_15 = arith.constant dense<0xFF800000> : vector<8xf32>
    %30 = vector.multi_reduction <maximumf>, %29, %cst_15 [1] : vector<8x8xf32> to vector<8xf32>
    %31 = vector.shape_cast %30 : vector<8xf32> to vector<8x1xf32>
    %32 = vector.broadcast %31 : vector<8x1xf32> to vector<8x8xf32>
    %33 = arith.subf %29, %32 : vector<8x8xf32>
    %34 = math.exp %33 : vector<8x8xf32>
    %cst_16 = arith.constant dense<0.000000e+00> : vector<8xf32>
    %35 = vector.multi_reduction <add>, %34, %cst_16 [1] : vector<8x8xf32> to vector<8xf32>
    %36 = vector.shape_cast %35 : vector<8xf32> to vector<8x1xf32>
    %37 = tpu.reciprocal %36 {approx = true} : vector<8x1xf32> -> vector<8x1xf32>
    %38 = vector.broadcast %37 : vector<8x1xf32> to vector<8x8xf32>
    %39 = arith.mulf %34, %38 : vector<8x8xf32>
    %40 = arith.truncf %39 : vector<8x8xf32> to vector<8x8xbf16>
    %cst_17 = arith.constant dense<0.000000e+00> : vector<8x8xf32>
    %41 = tpu.matmul %40, %27, %cst_17 {dimension_numbers = #tpu.dot_dimension_numbers<[1], [0], [0], [1], [0, 0, 1, 1], [], []>} : vector<8x8xbf16>, vector<8x8xbf16>, vector<8x8xf32> -> vector<8x8xf32>
    %42 = arith.truncf %41 : vector<8x8xf32> to vector<8x8xbf16>
    %c0_18 = arith.constant 0 : index
    %c0_19 = arith.constant 0 : index
    %43 = vector.load %arg12[%c0_18, %c0_19] : memref<8x32xbf16, #tpu.memory_space<vmem>>, vector<8x8xbf16>
    tpu.vector_store %arg12[%c0_18, %c0_19], %42 {strides = array<i32>} : memref<8x32xbf16, #tpu.memory_space<vmem>>, vector<8x8xbf16>,
    %44 = vector.extract_strided_slice %14 {offsets = [0, 8], sizes = [8, 8], strides = [1, 1]} : vector<8x32xbf16> to vector<8x8xbf16>
    %45 = vector.extract_strided_slice %24 {offsets = [0, 8], sizes = [8, 8], strides = [1, 1]} : vector<8x64xbf16> to vector<8x8xbf16>
    %46 = vector.extract_strided_slice %24 {offsets = [0, 40], sizes = [8, 8], strides = [1, 1]} : vector<8x64xbf16> to vector<8x8xbf16>
    %cst_20 = arith.constant dense<0.000000e+00> : vector<8x8xf32>
    %47 = tpu.matmul %44, %45, %cst_20 {dimension_numbers = #tpu.dot_dimension_numbers<[1], [1], [0], [0], [0, 0, 1, 0], [], []>} : vector<8x8xbf16>, vector<8x8xbf16>, vector<8x8xf32> -> vector<8x8xf32>
    %48 = arith.addf %47, %23 : vector<8x8xf32>
    %cst_21 = arith.constant dense<0xFF800000> : vector<8xf32>
    %49 = vector.multi_reduction <maximumf>, %48, %cst_21 [1] : vector<8x8xf32> to vector<8xf32>
    %50 = vector.shape_cast %49 : vector<8xf32> to vector<8x1xf32>
    %51 = vector.broadcast %50 : vector<8x1xf32> to vector<8x8xf32>
    %52 = arith.subf %48, %51 : vector<8x8xf32>
    %53 = math.exp %52 : vector<8x8xf32>
    %cst_22 = arith.constant dense<0.000000e+00> : vector<8xf32>
    %54 = vector.multi_reduction <add>, %53, %cst_22 [1] : vector<8x8xf32> to vector<8xf32>
    %55 = vector.shape_cast %54 : vector<8xf32> to vector<8x1xf32>
    %56 = tpu.reciprocal %55 {approx = true} : vector<8x1xf32> -> vector<8x1xf32>
    %57 = vector.broadcast %56 : vector<8x1xf32> to vector<8x8xf32>
    %58 = arith.mulf %53, %57 : vector<8x8xf32>
    %59 = arith.truncf %58 : vector<8x8xf32> to vector<8x8xbf16>
    %cst_23 = arith.constant dense<0.000000e+00> : vector<8x8xf32>
    %60 = tpu.matmul %59, %46, %cst_23 {dimension_numbers = #tpu.dot_dimension_numbers<[1], [0], [0], [1], [0, 0, 1, 1], [], []>} : vector<8x8xbf16>, vector<8x8xbf16>, vector<8x8xf32> -> vector<8x8xf32>
    %61 = arith.truncf %60 : vector<8x8xf32> to vector<8x8xbf16>
    %c0_24 = arith.constant 0 : index
    %c8 = arith.constant 8 : index
    %62 = vector.load %arg12[%c0_24, %c8] : memref<8x32xbf16, #tpu.memory_space<vmem>>, vector<8x8xbf16>
    tpu.vector_store %arg12[%c0_24, %c8], %61 {strides = array<i32>} : memref<8x32xbf16, #tpu.memory_space<vmem>>, vector<8x8xbf16>,
    %63 = vector.extract_strided_slice %14 {offsets = [0, 16], sizes = [8, 8], strides = [1, 1]} : vector<8x32xbf16> to vector<8x8xbf16>
    %64 = vector.extract_strided_slice %24 {offsets = [0, 16], sizes = [8, 8], strides = [1, 1]} : vector<8x64xbf16> to vector<8x8xbf16>
    %65 = vector.extract_strided_slice %24 {offsets = [0, 48], sizes = [8, 8], strides = [1, 1]} : vector<8x64xbf16> to vector<8x8xbf16>
    %cst_25 = arith.constant dense<0.000000e+00> : vector<8x8xf32>
    %66 = tpu.matmul %63, %64, %cst_25 {dimension_numbers = #tpu.dot_dimension_numbers<[1], [1], [0], [0], [0, 0, 1, 0], [], []>} : vector<8x8xbf16>, vector<8x8xbf16>, vector<8x8xf32> -> vector<8x8xf32>
    %67 = arith.addf %66, %23 : vector<8x8xf32>
    %cst_26 = arith.constant dense<0xFF800000> : vector<8xf32>
    %68 = vector.multi_reduction <maximumf>, %67, %cst_26 [1] : vector<8x8xf32> to vector<8xf32>
    %69 = vector.shape_cast %68 : vector<8xf32> to vector<8x1xf32>
    %70 = vector.broadcast %69 : vector<8x1xf32> to vector<8x8xf32>
    %71 = arith.subf %67, %70 : vector<8x8xf32>
    %72 = math.exp %71 : vector<8x8xf32>
    %cst_27 = arith.constant dense<0.000000e+00> : vector<8xf32>
    %73 = vector.multi_reduction <add>, %72, %cst_27 [1] : vector<8x8xf32> to vector<8xf32>
    %74 = vector.shape_cast %73 : vector<8xf32> to vector<8x1xf32>
    %75 = tpu.reciprocal %74 {approx = true} : vector<8x1xf32> -> vector<8x1xf32>
    %76 = vector.broadcast %75 : vector<8x1xf32> to vector<8x8xf32>
    %77 = arith.mulf %72, %76 : vector<8x8xf32>
    %78 = arith.truncf %77 : vector<8x8xf32> to vector<8x8xbf16>
    %cst_28 = arith.constant dense<0.000000e+00> : vector<8x8xf32>
    %79 = tpu.matmul %78, %65, %cst_28 {dimension_numbers = #tpu.dot_dimension_numbers<[1], [0], [0], [1], [0, 0, 1, 1], [], []>} : vector<8x8xbf16>, vector<8x8xbf16>, vector<8x8xf32> -> vector<8x8xf32>
    %80 = arith.truncf %79 : vector<8x8xf32> to vector<8x8xbf16>
    %c0_29 = arith.constant 0 : index
    %c16 = arith.constant 16 : index
    %81 = vector.load %arg12[%c0_29, %c16] : memref<8x32xbf16, #tpu.memory_space<vmem>>, vector<8x8xbf16>
    tpu.vector_store %arg12[%c0_29, %c16], %80 {strides = array<i32>} : memref<8x32xbf16, #tpu.memory_space<vmem>>, vector<8x8xbf16>,
    %82 = vector.extract_strided_slice %14 {offsets = [0, 24], sizes = [8, 8], strides = [1, 1]} : vector<8x32xbf16> to vector<8x8xbf16>
    %83 = vector.extract_strided_slice %24 {offsets = [0, 24], sizes = [8, 8], strides = [1, 1]} : vector<8x64xbf16> to vector<8x8xbf16>
    %84 = vector.extract_strided_slice %24 {offsets = [0, 56], sizes = [8, 8], strides = [1, 1]} : vector<8x64xbf16> to vector<8x8xbf16>
    %cst_30 = arith.constant dense<0.000000e+00> : vector<8x8xf32>
    %85 = tpu.matmul %82, %83, %cst_30 {dimension_numbers = #tpu.dot_dimension_numbers<[1], [1], [0], [0], [0, 0, 1, 0], [], []>} : vector<8x8xbf16>, vector<8x8xbf16>, vector<8x8xf32> -> vector<8x8xf32>
    %86 = arith.addf %85, %23 : vector<8x8xf32>
    %cst_31 = arith.constant dense<0xFF800000> : vector<8xf32>
    %87 = vector.multi_reduction <maximumf>, %86, %cst_31 [1] : vector<8x8xf32> to vector<8xf32>
    %88 = vector.shape_cast %87 : vector<8xf32> to vector<8x1xf32>
    %89 = vector.broadcast %88 : vector<8x1xf32> to vector<8x8xf32>
    %90 = arith.subf %86, %89 : vector<8x8xf32>
    %91 = math.exp %90 : vector<8x8xf32>
    %cst_32 = arith.constant dense<0.000000e+00> : vector<8xf32>
    %92 = vector.multi_reduction <add>, %91, %cst_32 [1] : vector<8x8xf32> to vector<8xf32>
    %93 = vector.shape_cast %92 : vector<8xf32> to vector<8x1xf32>
    %94 = tpu.reciprocal %93 {approx = true} : vector<8x1xf32> -> vector<8x1xf32>
    %95 = vector.broadcast %94 : vector<8x1xf32> to vector<8x8xf32>
    %96 = arith.mulf %91, %95 : vector<8x8xf32>
    %97 = arith.truncf %96 : vector<8x8xf32> to vector<8x8xbf16>
    %cst_33 = arith.constant dense<0.000000e+00> : vector<8x8xf32>
    %98 = tpu.matmul %97, %84, %cst_33 {dimension_numbers = #tpu.dot_dimension_numbers<[1], [0], [0], [1], [0, 0, 1, 1], [], []>} : vector<8x8xbf16>, vector<8x8xbf16>, vector<8x8xf32> -> vector<8x8xf32>
    %99 = arith.truncf %98 : vector<8x8xf32> to vector<8x8xbf16>
    %c0_34 = arith.constant 0 : index
    %c24 = arith.constant 24 : index
    %100 = vector.load %arg12[%c0_34, %c24] : memref<8x32xbf16, #tpu.memory_space<vmem>>, vector<8x8xbf16>
    tpu.vector_store %arg12[%c0_34, %c24], %99 {strides = array<i32>} : memref<8x32xbf16, #tpu.memory_space<vmem>>, vector<8x8xbf16>,
    %c0_35 = arith.constant 0 : index
    %c0_36 = arith.constant 0 : index
    %101 = vector.load %arg12[%c0_35, %c0_36] : memref<8x32xbf16, #tpu.memory_space<vmem>>, vector<8x32xbf16>
    %c0_37 = arith.constant 0 : index
    %c0_38 = arith.constant 0 : index
    %102 = vector.load %arg8[%c0_37, %c0_38] : memref<32x32xbf16, #tpu.memory_space<vmem>>, vector<32x32xbf16>
    %cst_39 = arith.constant dense<0.000000e+00> : vector<8x32xf32>
    %103 = tpu.matmul %101, %102, %cst_39 {dimension_numbers = #tpu.dot_dimension_numbers<[1], [0], [0], [1], [0, 0, 1, 1], [], []>} : vector<8x32xbf16>, vector<32x32xbf16>, vector<8x32xf32> -> vector<8x32xf32>
    %c0_40 = arith.constant 0 : index
    %c0_41 = arith.constant 0 : index
    %104 = vector.load %arg9[%c0_40, %c0_41] : memref<1x32xf32, #tpu.memory_space<vmem>>, vector<1x32xf32>
    %105 = vector.broadcast %104 : vector<1x32xf32> to vector<8x32xf32>
    %106 = arith.addf %103, %105 : vector<8x32xf32>
    %c0_42 = arith.constant 0 : index
    %c0_43 = arith.constant 0 : index
    %c0_44 = arith.constant 0 : index
    %107 = vector.load %arg10[%c0_42, %c0_43, %c0_44] : memref<1x8x32xf32, #tpu.memory_space<vmem>>, vector<1x8x32xf32>
    %108 = vector.shape_cast %107 : vector<1x8x32xf32> to vector<8x32xf32>
    %109 = vector.shape_cast %106 : vector<8x32xf32> to vector<1x8x32xf32>
    tpu.vector_store %arg10[%c0_42, %c0_43, %c0_44], %109 {strides = array<i32>} : memref<1x8x32xf32, #tpu.memory_space<vmem>>, vector<1x8x32xf32>,
    return
  }
  func.func @transform_0(%arg0: i32, %arg1: i32) -> (i32, i32, i32) {
    %c0_i32 = arith.constant 0 : i32
    %c0_i32_0 = arith.constant 0 : i32
    %c0_i32_1 = arith.constant 0 : i32
    return %arg0, %c0_i32, %c0_i32_0 : i32, i32, i32
  }
  func.func @transform_1(%arg0: i32, %arg1: i32) -> (i32, i32, i32) {
    %c0_i32 = arith.constant 0 : i32
    %c0_i32_0 = arith.constant 0 : i32
    %c0_i32_1 = arith.constant 0 : i32
    return %arg0, %c0_i32, %c0_i32_0 : i32, i32, i32
  }
  func.func @transform_2(%arg0: i32, %arg1: i32) -> (i32, i32) {
    %c0_i32 = arith.constant 0 : i32
    %c0_i32_0 = arith.constant 0 : i32
    %c0_i32_1 = arith.constant 0 : i32
    return %c0_i32, %c0_i32_0 : i32, i32
  }
  func.func @transform_3(%arg0: i32, %arg1: i32) -> (i32, i32) {
    %c0_i32 = arith.constant 0 : i32
    %c0_i32_0 = arith.constant 0 : i32
    %c0_i32_1 = arith.constant 0 : i32
    return %c0_i32, %c0_i32_0 : i32, i32
  }
  func.func @transform_4(%arg0: i32, %arg1: i32) -> (i32, i32) {
    %c0_i32 = arith.constant 0 : i32
    %c0_i32_0 = arith.constant 0 : i32
    %c0_i32_1 = arith.constant 0 : i32
    return %c0_i32, %c0_i32_0 : i32, i32
  }
  func.func @transform_5(%arg0: i32, %arg1: i32) -> (i32, i32) {
    %c0_i32 = arith.constant 0 : i32
    %c0_i32_0 = arith.constant 0 : i32
    %c0_i32_1 = arith.constant 0 : i32
    return %c0_i32, %c0_i32_0 : i32, i32
  }
  func.func @transform_6(%arg0: i32, %arg1: i32) -> (i32, i32) {
    %c0_i32 = arith.constant 0 : i32
    %c0_i32_0 = arith.constant 0 : i32
    %c0_i32_1 = arith.constant 0 : i32
    return %c0_i32, %c0_i32_0 : i32, i32
  }
  func.func @transform_7(%arg0: i32, %arg1: i32) -> (i32, i32) {
    %c0_i32 = arith.constant 0 : i32
    %c0_i32_0 = arith.constant 0 : i32
    %c0_i32_1 = arith.constant 0 : i32
    return %c0_i32, %c0_i32_0 : i32, i32
  }
  func.func @transform_8(%arg0: i32, %arg1: i32) -> (i32, i32, i32) {
    %c0_i32 = arith.constant 0 : i32
    %c0_i32_0 = arith.constant 0 : i32
    return %arg0, %arg1, %c0_i32 : i32, i32, i32
  }
}

</mosaic_0001>

<llo_original>
// kernel: multi_header_self_attention.1
$region0: #{multi_header_self_attention.1}
  #allocation0 [shape = 'u32[]', space=smem, size = 0x4, offset = 0x4, fixed_abs, tag = 'smem constant byte address 0x4 - core index']
  #allocation1 [shape = 'u32[72,128]{1,0:T(1,128)}', space=vmem, size = 0x9000, scoped, tag = 'internal scratch']
  #allocation2 [shape = 'bf16[8,64]{1,0:T(8,128)(2,1)}', space=vmem, size = 0x800, scoped, tag = 'scratch operand']
  #allocation3 [shape = 'bf16[8,32]{1,0:T(8,128)(2,1)}', space=vmem, size = 0x800, scoped, tag = 'scratch operand']
  %s0 = inlined_call_operand.hbm [shape: f32[2,8,32], index: 0, kind: input, shape index: {}]
  %s1 = inlined_call_operand.vmem [shape: s32[2,1,8], index: 1, kind: input, shape index: {}]
  %s2 = inlined_call_operand.hbm [shape: bf16[32,32], index: 2, kind: input, shape index: {}]
  %s3 = inlined_call_operand.vmem [shape: f32[1,32], index: 3, kind: input, shape index: {}]
  %s4 = inlined_call_operand.hbm [shape: bf16[32,64], index: 4, kind: input, shape index: {}]
  %s5 = inlined_call_operand.hbm [shape: f32[1,64], index: 5, kind: input, shape index: {}]
  %s6 = inlined_call_operand.hbm [shape: bf16[32,32], index: 6, kind: input, shape index: {}]
  %s7 = inlined_call_operand.hbm [shape: f32[1,32], index: 7, kind: input, shape index: {}]
  %s8 = inlined_call_operand.hbm [shape: f32[2,8,32], index: 8, kind: output, shape index: {}]
  %s9 = sld [smem:[#allocation0]]
  $region93: #{multi_header_self_attention.1} parent=0
    _
  %s11 = ssub.s32 1, %s9
  %s12 = scalar_select 0, %s11, %s9
  $region1: #{multi_header_self_attention.1} parent=0
    #allocation4 [shape = 'u8[8192]{0}', space=vmem, size = 0x2000, scoped, tag = 'input window, operand 0']
    #allocation5 [shape = 's32[2]{0}', space=sflag, size = 0x8, scoped, tag = 'scoped memory for multi_header_self_attention.1']
    #allocation6 [shape = 's32[2]{0}', space=sflag, size = 0x8, scoped, tag = 'scoped memory for multi_header_self_attention.1']
    #allocation7 [shape = 'u8[8192]{0}', space=vmem, size = 0x2000, scoped, tag = 'input window, operand 2, single buffered']
    #allocation8 [shape = 's32[1]{0}', space=sflag, size = 0x4, scoped, tag = 'scoped memory for multi_header_self_attention.1']
    #allocation9 [shape = 'u8[8192]{0}', space=vmem, size = 0x2000, scoped, tag = 'input window, operand 4, single buffered']
    #allocation10 [shape = 'u8[512]{0}', space=vmem, size = 0x400, scoped, tag = 'input window, operand 5, single buffered']
    #allocation11 [shape = 's32[1]{0}', space=sflag, size = 0x4, scoped, tag = 'scoped memory for multi_header_self_attention.1']
    #allocation12 [shape = 'u8[8192]{0}', space=vmem, size = 0x2000, scoped, tag = 'input window, operand 6, single buffered']
    #allocation13 [shape = 'u8[512]{0}', space=vmem, size = 0x400, scoped, tag = 'input window, operand 7, single buffered']
    #allocation14 [shape = 's32[1]{0}', space=sflag, size = 0x4, scoped, tag = 'scoped memory for multi_header_self_attention.1']
    #allocation15 [shape = 'u8[8192]{0}', space=vmem, size = 0x2000, scoped, tag = 'output window, operand 0']
    %13 = vsyncpa [#allocation5], 0
    %s14 = scalar_lea.sflag [#allocation5], 1
    %15 = vsyncpa %s14, 0
    %16 = vsyncpa [#allocation8], 0
    %17 = vsyncpa [#allocation11], 0
    %18 = vsyncpa [#allocation14], 0
    %19 = vsyncpa [#allocation6], 0
    %s20 = scalar_lea.sflag [#allocation6], 1
    %21 = vsyncpa %s20, 0
    loop: start=0, step=1, limit=4
    $region2: #{multi_header_self_attention.1} parent=1 // loop_pre_header
      _
    $region3: #{multi_header_self_attention.1} parent=1 // loop_header
      %s23 = sphi 0, %s27
      %p24 = scmp.ge.s32.totalorder %s23, 4
      %s30 = sphi 0, %s42
      %s31 = sphi 0, %s38
      %s32 = sphi 0, %s30
      %s33 = sphi 0, %s31
      %s34 = sphi 0, %s32
      %s35 = sphi 0, %s33
      %s45 = sphi 0, %s47
      %s48 = sphi 0, %s45
      %s49 = sphi 0, %s48
      %s65 = sphi 0, %s49
      %s71 = sphi 0, %s73
      %s74 = sphi 0, %s71
      %s75 = sphi 0, %s74
      %s91 = sphi 0, %s75
      %s95 = sphi 0, %s95
      %s97 = sphi 0, %s95
      %s98 = sphi 0, %s97
      %s112 = sphi 0, %s98
      %s116 = sphi 0, %s116
      %s118 = sphi 0, %s116
      %s119 = sphi 0, %s118
      %s133 = sphi 0, %s119
      %s137 = sphi 0, %s137
      %s139 = sphi 0, %s137
      %s140 = sphi 0, %s139
      %s154 = sphi 0, %s140
      %s158 = sphi 0, %s158
      %s160 = sphi 0, %s158
      %s161 = sphi 0, %s160
      %s175 = sphi 0, %s161
      %s179 = sphi 0, %s179
      %s181 = sphi 0, %s179
      %s182 = sphi 0, %s181
      %s196 = sphi 0, %s182
      %s200 = sphi 0, %s200
      %s202 = sphi 0, %s200
      %s203 = sphi 0, %s202
      %s217 = sphi 0, %s203
      %s225 = sphi 0, %s227
      %s228 = sphi 0, %s225
      %s229 = sphi 0, %s228
      %s245 = sphi 0, %s229
    $region4: #{multi_header_self_attention.1} parent=1 // loop_header_branch
      %26 = sbr.rel (%p24) target = $region8
    $region5: #{multi_header_self_attention.1} parent=1 // loop_body
      %s28 = ssub.s32 %s23, 1
      %s29 = ssub.s32 %s23, 2
      %s36 = sadd.s32 1, %s31
      %p37 = scmp.ge.s32.totalorder %s36, 1
      %s38 = scalar_select %p37, 0, %s36
      %s39 = sadd.s32 1, %s30
      %s40 = scalar_select %p37, %s39, %s30
      %p41 = scmp.ge.s32.totalorder %s40, 2
      %s42 = scalar_select %p41, 0, %s40
      %s43 = ssub.s32 %s30, %s42
      %p44 = scmp.eq.s32.totalorder %s43, 0
      %s46 = sadd.s32 %s45, 1
      %s47 = scalar_select %p44, %s45, %s46
      %p50 = pneg %p44
      %p51 = scmp.eq.s32.totalorder %s23, 1
      %p52 = por %p50, %p51
      %p53 = scmp.ne.s32.totalorder %s45, %s48
      %p54 = scmp.eq.s32.totalorder %s23, 0
      %p55 = por %p53, %p54
      %p56 = scmp.ne.s32.totalorder %s45, %s48
      %p57 = scmp.eq.s32.totalorder %s28, 1
      %p58 = por %p56, %p57
      %p59 = scmp.ne.s32.totalorder %s48, %s49
      %p60 = scmp.eq.s32.totalorder %s28, 0
      %p61 = por %p59, %p60
      %p62 = scmp.ne.s32.totalorder %s48, %s49
      %p63 = scmp.eq.s32.totalorder %s29, 1
      %p64 = por %p62, %p63
      %p66 = scmp.ne.s32.totalorder %s49, %s65
      %p67 = scmp.eq.s32.totalorder %s29, 0
      %p68 = por %p66, %p67
      %s69 = ssub.s32 %s30, %s42
      %p70 = scmp.eq.s32.totalorder %s69, 0
      %s72 = sadd.s32 %s71, 1
      %s73 = scalar_select %p70, %s71, %s72
      %p76 = pneg %p70
      %p77 = scmp.eq.s32.totalorder %s23, 1
      %p78 = por %p76, %p77
      %p79 = scmp.ne.s32.totalorder %s71, %s74
      %p80 = scmp.eq.s32.totalorder %s23, 0
      %p81 = por %p79, %p80
      %p82 = scmp.ne.s32.totalorder %s71, %s74
      %p83 = scmp.eq.s32.totalorder %s28, 1
      %p84 = por %p82, %p83
      %p85 = scmp.ne.s32.totalorder %s74, %s75
      %p86 = scmp.eq.s32.totalorder %s28, 0
      %p87 = por %p85, %p86
      %p88 = scmp.ne.s32.totalorder %s74, %s75
      %p89 = scmp.eq.s32.totalorder %s29, 1
      %p90 = por %p88, %p89
      %p92 = scmp.ne.s32.totalorder %s75, %s91
      %p93 = scmp.eq.s32.totalorder %s29, 0
      %p94 = por %p92, %p93
      %s96 = sadd.s32 %s95, 1
      %p99 = scmp.eq.s32.totalorder %s23, 1
      %p100 = scmp.ne.s32.totalorder %s95, %s97
      %p101 = scmp.eq.s32.totalorder %s23, 0
      %p102 = por %p100, %p101
      %p103 = scmp.ne.s32.totalorder %s95, %s97
      %p104 = scmp.eq.s32.totalorder %s28, 1
      %p105 = por %p103, %p104
      %p106 = scmp.ne.s32.totalorder %s97, %s98
      %p107 = scmp.eq.s32.totalorder %s28, 0
      %p108 = por %p106, %p107
      %p109 = scmp.ne.s32.totalorder %s97, %s98
      %p110 = scmp.eq.s32.totalorder %s29, 1
      %p111 = por %p109, %p110
      %p113 = scmp.ne.s32.totalorder %s98, %s112
      %p114 = scmp.eq.s32.totalorder %s29, 0
      %p115 = por %p113, %p114
      %s117 = sadd.s32 %s116, 1
      %p120 = scmp.eq.s32.totalorder %s23, 1
      %p121 = scmp.ne.s32.totalorder %s116, %s118
      %p122 = scmp.eq.s32.totalorder %s23, 0
      %p123 = por %p121, %p122
      %p124 = scmp.ne.s32.totalorder %s116, %s118
      %p125 = scmp.eq.s32.totalorder %s28, 1
      %p126 = por %p124, %p125
      %p127 = scmp.ne.s32.totalorder %s118, %s119
      %p128 = scmp.eq.s32.totalorder %s28, 0
      %p129 = por %p127, %p128
      %p130 = scmp.ne.s32.totalorder %s118, %s119
      %p131 = scmp.eq.s32.totalorder %s29, 1
      %p132 = por %p130, %p131
      %p134 = scmp.ne.s32.totalorder %s119, %s133
      %p135 = scmp.eq.s32.totalorder %s29, 0
      %p136 = por %p134, %p135
      %s138 = sadd.s32 %s137, 1
      %p141 = scmp.eq.s32.totalorder %s23, 1
      %p142 = scmp.ne.s32.totalorder %s137, %s139
      %p143 = scmp.eq.s32.totalorder %s23, 0
      %p144 = por %p142, %p143
      %p145 = scmp.ne.s32.totalorder %s137, %s139
      %p146 = scmp.eq.s32.totalorder %s28, 1
      %p147 = por %p145, %p146
      %p148 = scmp.ne.s32.totalorder %s139, %s140
      %p149 = scmp.eq.s32.totalorder %s28, 0
      %p150 = por %p148, %p149
      %p151 = scmp.ne.s32.totalorder %s139, %s140
      %p152 = scmp.eq.s32.totalorder %s29, 1
      %p153 = por %p151, %p152
      %p155 = scmp.ne.s32.totalorder %s140, %s154
      %p156 = scmp.eq.s32.totalorder %s29, 0
      %p157 = por %p155, %p156
      %s159 = sadd.s32 %s158, 1
      %p162 = scmp.eq.s32.totalorder %s23, 1
      %p163 = scmp.ne.s32.totalorder %s158, %s160
      %p164 = scmp.eq.s32.totalorder %s23, 0
      %p165 = por %p163, %p164
      %p166 = scmp.ne.s32.totalorder %s158, %s160
      %p167 = scmp.eq.s32.totalorder %s28, 1
      %p168 = por %p166, %p167
      %p169 = scmp.ne.s32.totalorder %s160, %s161
      %p170 = scmp.eq.s32.totalorder %s28, 0
      %p171 = por %p169, %p170
      %p172 = scmp.ne.s32.totalorder %s160, %s161
      %p173 = scmp.eq.s32.totalorder %s29, 1
      %p174 = por %p172, %p173
      %p176 = scmp.ne.s32.totalorder %s161, %s175
      %p177 = scmp.eq.s32.totalorder %s29, 0
      %p178 = por %p176, %p177
      %s180 = sadd.s32 %s179, 1
      %p183 = scmp.eq.s32.totalorder %s23, 1
      %p184 = scmp.ne.s32.totalorder %s179, %s181
      %p185 = scmp.eq.s32.totalorder %s23, 0
      %p186 = por %p184, %p185
      %p187 = scmp.ne.s32.totalorder %s179, %s181
      %p188 = scmp.eq.s32.totalorder %s28, 1
      %p189 = por %p187, %p188
      %p190 = scmp.ne.s32.totalorder %s181, %s182
      %p191 = scmp.eq.s32.totalorder %s28, 0
      %p192 = por %p190, %p191
      %p193 = scmp.ne.s32.totalorder %s181, %s182
      %p194 = scmp.eq.s32.totalorder %s29, 1
      %p195 = por %p193, %p194
      %p197 = scmp.ne.s32.totalorder %s182, %s196
      %p198 = scmp.eq.s32.totalorder %s29, 0
      %p199 = por %p197, %p198
      %s201 = sadd.s32 %s200, 1
      %p204 = scmp.eq.s32.totalorder %s23, 1
      %p205 = scmp.ne.s32.totalorder %s200, %s202
      %p206 = scmp.eq.s32.totalorder %s23, 0
      %p207 = por %p205, %p206
      %p208 = scmp.ne.s32.totalorder %s200, %s202
      %p209 = scmp.eq.s32.totalorder %s28, 1
      %p210 = por %p208, %p209
      %p211 = scmp.ne.s32.totalorder %s202, %s203
      %p212 = scmp.eq.s32.totalorder %s28, 0
      %p213 = por %p211, %p212
      %p214 = scmp.ne.s32.totalorder %s202, %s203
      %p215 = scmp.eq.s32.totalorder %s29, 1
      %p216 = por %p214, %p215
      %p218 = scmp.ne.s32.totalorder %s203, %s217
      %p219 = scmp.eq.s32.totalorder %s29, 0
      %p220 = por %p218, %p219
      %s221 = ssub.s32 %s30, %s42
      %s222 = ssub.s32 %s31, %s38
      %s223 = sor.u32 %s221, %s222
      %p224 = scmp.eq.s32.totalorder %s223, 0
      %s226 = sadd.s32 %s225, 1
      %s227 = scalar_select %p224, %s225, %s226
      %p230 = pneg %p224
      %p231 = scmp.eq.s32.totalorder %s23, 1
      %p232 = por %p230, %p231
      %p233 = scmp.ne.s32.totalorder %s225, %s228
      %p234 = scmp.eq.s32.totalorder %s23, 0
      %p235 = por %p233, %p234
      %p236 = scmp.ne.s32.totalorder %s225, %s228
      %p237 = scmp.eq.s32.totalorder %s28, 1
      %p238 = por %p236, %p237
      %p239 = scmp.ne.s32.totalorder %s228, %s229
      %p240 = scmp.eq.s32.totalorder %s28, 0
      %p241 = por %p239, %p240
      %p242 = scmp.ne.s32.totalorder %s228, %s229
      %p243 = scmp.eq.s32.totalorder %s29, 1
      %p244 = por %p242, %p243
      %p246 = scmp.ne.s32.totalorder %s229, %s245
      %p247 = scmp.eq.s32.totalorder %s29, 0
      %p248 = por %p246, %p247
      %p249 = scmp.le.s32.totalorder 1, %s23
      %p250 = scmp.lt.s32.totalorder %s23, 3
      %p251 = pnand %p249, %p250
      %p252 = pneg %p251
      // Predicated region
      $region9: #{multi_header_self_attention.1} parent=5 // pred_check
        _
      $region10: #{multi_header_self_attention.1} parent=5 // pred_check_branch
        %254 = sbr.rel (%p251) target = $region12
      $region11: #{multi_header_self_attention.1} parent=5 // pred_region
        %s255 = ssub.s32 %s23, 1
        // Predicated region
        $region13: #{multi_header_self_attention.1} parent=11 // pred_check
          %p256 = pneg %p108
        $region14: #{multi_header_self_attention.1} parent=11 // pred_check_branch
          %258 = sbr.rel (%p256) target = $region16
        $region15: #{multi_header_self_attention.1} parent=11 // pred_region
          %260 = vsyncadd [#allocation8], 0
          %s261 = sshll.u32 %s2, 4
          %s262 = int_to_ptr.hbm [resolvable:$true] %s261
          %s263 = sshll.u32 [#allocation7], 4
          %s264 = int_to_ptr.vmem [resolvable:$true] %s263
          %269 = dma.hbm_to_vmem [thread:$0]  %s262, 256, %s264, [#allocation8], 64, 64, 4
        $region16: #{multi_header_self_attention.1} parent=11 // pred_fallthru
          _
        // Predicated region
        $region17: #{multi_header_self_attention.1} parent=11 // pred_check
          %p270 = pneg %p129
        $region18: #{multi_header_self_attention.1} parent=11 // pred_check_branch
          %272 = sbr.rel (%p270) target = $region20
        $region19: #{multi_header_self_attention.1} parent=11 // pred_region
          _
        $region20: #{multi_header_self_attention.1} parent=11 // pred_fallthru
          _
        // Predicated region
        $region21: #{multi_header_self_attention.1} parent=11 // pred_check
          %p273 = pneg %p150
        $region22: #{multi_header_self_attention.1} parent=11 // pred_check_branch
          %275 = sbr.rel (%p273) target = $region24
        $region23: #{multi_header_self_attention.1} parent=11 // pred_region
          %277 = vsyncadd [#allocation8], 0
          %s278 = sshll.u32 %s4, 4
          %s279 = int_to_ptr.hbm [resolvable:$true] %s278
          %s280 = sshll.u32 [#allocation9], 4
          %s281 = int_to_ptr.vmem [resolvable:$true] %s280
          %286 = dma.hbm_to_vmem [thread:$0]  %s279, 256, %s281, [#allocation8], 64, 64, 4
        $region24: #{multi_header_self_attention.1} parent=11 // pred_fallthru
          _
        // Predicated region
        $region25: #{multi_header_self_attention.1} parent=11 // pred_check
          %p287 = pneg %p171
        $region26: #{multi_header_self_attention.1} parent=11 // pred_check_branch
          %289 = sbr.rel (%p287) target = $region28
        $region27: #{multi_header_self_attention.1} parent=11 // pred_region
          %291 = vsyncadd [#allocation11], 0
          %s293 = sshll.u32 %s5, 4
          %s294 = int_to_ptr.hbm [resolvable:$true] %s293
          %s295 = sshll.u32 [#allocation10], 4
          %s296 = int_to_ptr.vmem [resolvable:$true] %s295
          %298 = dma.hbm_to_vmem [thread:$0]  %s294, 16, %s296, [#allocation11]
        $region28: #{multi_header_self_attention.1} parent=11 // pred_fallthru
          _
        // Predicated region
        $region29: #{multi_header_self_attention.1} parent=11 // pred_check
          %p299 = pneg %p192
        $region30: #{multi_header_self_attention.1} parent=11 // pred_check_branch
          %301 = sbr.rel (%p299) target = $region32
        $region31: #{multi_header_self_attention.1} parent=11 // pred_region
          %303 = vsyncadd [#allocation11], 0
          %s304 = sshll.u32 %s6, 4
          %s305 = int_to_ptr.hbm [resolvable:$true] %s304
          %s306 = sshll.u32 [#allocation12], 4
          %s307 = int_to_ptr.vmem [resolvable:$true] %s306
          %312 = dma.hbm_to_vmem [thread:$0]  %s305, 256, %s307, [#allocation11], 64, 64, 4
        $region32: #{multi_header_self_attention.1} parent=11 // pred_fallthru
          _
        // Predicated region
        $region33: #{multi_header_self_attention.1} parent=11 // pred_check
          %p313 = pneg %p213
        $region34: #{multi_header_self_attention.1} parent=11 // pred_check_branch
          %315 = sbr.rel (%p313) target = $region36
        $region35: #{multi_header_self_attention.1} parent=11 // pred_region
          %317 = vsyncadd [#allocation14], 0
          %s319 = sshll.u32 %s7, 4
          %s320 = int_to_ptr.hbm [resolvable:$true] %s319
          %s321 = sshll.u32 [#allocation13], 4
          %s322 = int_to_ptr.vmem [resolvable:$true] %s321
          %324 = dma.hbm_to_vmem [thread:$0]  %s320, 16, %s322, [#allocation14]
        $region36: #{multi_header_self_attention.1} parent=11 // pred_fallthru
          _
      $region12: #{multi_header_self_attention.1} parent=5 // pred_fallthru
        _
      %p325 = scmp.lt.s32.totalorder %s23, 2
      // Predicated region
      $region37: #{multi_header_self_attention.1} parent=5 // pred_check
        %p326 = pneg %p325
      $region38: #{multi_header_self_attention.1} parent=5 // pred_check_branch
        %328 = sbr.rel (%p326) target = $region40
      $region39: #{multi_header_self_attention.1} parent=5 // pred_region
        // Predicated region
        $region41: #{multi_header_self_attention.1} parent=39 // pred_check
          %p329 = pneg %p55
        $region42: #{multi_header_self_attention.1} parent=39 // pred_check_branch
          %331 = sbr.rel (%p329) target = $region44
        $region43: #{multi_header_self_attention.1} parent=39 // pred_region
          %s332 = sand.u32 %s45, 1
          %s333 = scalar_lea.sflag [#allocation5], %s332
          %s334 = sand.u32 %s45, 1
          %s335 = smul.addr %s334, 8
          %s336 = scalar_lea.vmem [#allocation4], %s335
          %338 = vsyncadd %s333, 0
          %s339 = smul.addr %s30, 8
          %s340 = scalar_lea.hbm %s0, %s339
          %s342 = sshll.u32 %s340, 4
          %s343 = int_to_ptr.hbm [resolvable:$true] %s342
          %s344 = sshll.u32 %s336, 4
          %s345 = int_to_ptr.vmem [resolvable:$true] %s344
          %347 = dma.hbm_to_vmem [thread:$0]  %s343, 128, %s345, %s333
        $region44: #{multi_header_self_attention.1} parent=39 // pred_fallthru
          _
        // Predicated region
        $region45: #{multi_header_self_attention.1} parent=39 // pred_check
          %p348 = pneg %p81
        $region46: #{multi_header_self_attention.1} parent=39 // pred_check_branch
          %350 = sbr.rel (%p348) target = $region48
        $region47: #{multi_header_self_attention.1} parent=39 // pred_region
          %p351 = scmp.lt.s32.totalorder %s30, 1
          %s352 = scalar_select %p351, %s30, 1
          %s353 = scalar_lea.vmem %s1, %s352
        $region48: #{multi_header_self_attention.1} parent=39 // pred_fallthru
          _
      $region40: #{multi_header_self_attention.1} parent=5 // pred_fallthru
        _
      %p354 = scmp.le.s32.totalorder 1, %s23
      %p355 = scmp.lt.s32.totalorder %s23, 3
      %p356 = pnand %p354, %p355
      %p357 = pneg %p356
      // Predicated region
      $region49: #{multi_header_self_attention.1} parent=5 // pred_check
        _
      $region50: #{multi_header_self_attention.1} parent=5 // pred_check_branch
        %359 = sbr.rel (%p356) target = $region52
      $region51: #{multi_header_self_attention.1} parent=5 // pred_region
        %s360 = ssub.s32 %s23, 1
        %s361 = sand.u32 %s48, 1
        %s362 = scalar_lea.sflag [#allocation5], %s361
        %s363 = sand.u32 %s48, 1
        %s364 = smul.addr %s363, 8
        %s365 = scalar_lea.vmem [#allocation4], %s364
        // Predicated region
        $region53: #{multi_header_self_attention.1} parent=51 // pred_check
          %p366 = pneg %p61
        $region54: #{multi_header_self_attention.1} parent=51 // pred_check_branch
          %368 = sbr.rel (%p366) target = $region56
        $region55: #{multi_header_self_attention.1} parent=51 // pred_region
          %370 = dma.done %s362, 128
        $region56: #{multi_header_self_attention.1} parent=51 // pred_fallthru
          _
        // Predicated region
        $region57: #{multi_header_self_attention.1} parent=51 // pred_check
          %p371 = pneg %p108
        $region58: #{multi_header_self_attention.1} parent=51 // pred_check_branch
          %373 = sbr.rel (%p371) target = $region60
        $region59: #{multi_header_self_attention.1} parent=51 // pred_region
          %375 = dma.done [#allocation8], 256
        $region60: #{multi_header_self_attention.1} parent=51 // pred_fallthru
          _
        // Predicated region
        $region61: #{multi_header_self_attention.1} parent=51 // pred_check
          %p376 = pneg %p150
        $region62: #{multi_header_self_attention.1} parent=51 // pred_check_branch
          %378 = sbr.rel (%p376) target = $region64
        $region63: #{multi_header_self_attention.1} parent=51 // pred_region
          %380 = dma.done [#allocation8], 256
        $region64: #{multi_header_self_attention.1} parent=51 // pred_fallthru
          _
        // Predicated region
        $region65: #{multi_header_self_attention.1} parent=51 // pred_check
          %p381 = pneg %p171
        $region66: #{multi_header_self_attention.1} parent=51 // pred_check_branch
          %383 = sbr.rel (%p381) target = $region68
        $region67: #{multi_header_self_attention.1} parent=51 // pred_region
          %385 = dma.done [#allocation11], 16
        $region68: #{multi_header_self_attention.1} parent=51 // pred_fallthru
          _
        // Predicated region
        $region69: #{multi_header_self_attention.1} parent=51 // pred_check
          %p386 = pneg %p192
        $region70: #{multi_header_self_attention.1} parent=51 // pred_check_branch
          %388 = sbr.rel (%p386) target = $region72
        $region71: #{multi_header_self_attention.1} parent=51 // pred_region
          %390 = dma.done [#allocation11], 256
        $region72: #{multi_header_self_attention.1} parent=51 // pred_fallthru
          _
        // Predicated region
        $region73: #{multi_header_self_attention.1} parent=51 // pred_check
          %p391 = pneg %p213
        $region74: #{multi_header_self_attention.1} parent=51 // pred_check_branch
          %393 = sbr.rel (%p391) target = $region76
        $region75: #{multi_header_self_attention.1} parent=51 // pred_region
          %395 = dma.done [#allocation14], 16
        $region76: #{multi_header_self_attention.1} parent=51 // pred_fallthru
          _
        %s396 = sand.u32 %s48, 1
        %s397 = scalar_lea.sflag [#allocation5], %s396
        %s398 = sand.u32 %s48, 1
        %s399 = smul.addr %s398, 8
        %s400 = scalar_lea.vmem [#allocation4], %s399
        %p401 = pneg %p61
        %p402 = pneg %p58
        %p403 = scmp.lt.s32.totalorder %s32, 1
        %s404 = scalar_select %p403, %s32, 1
        %s405 = scalar_lea.vmem %s1, %s404
        %p406 = pneg %p87
        %p407 = pneg %p84
        %p408 = pneg %p108
        %p409 = pneg %p105
        %p410 = pneg %p129
        %p411 = pneg %p126
        %p412 = pneg %p150
        %p413 = pneg %p147
        %p414 = pneg %p171
        %p415 = pneg %p168
        %p416 = pneg %p192
        %p417 = pneg %p189
        %p418 = pneg %p213
        %p419 = pneg %p210
        %p420 = pneg %p241
        %p421 = pneg %p238
        %s422 = sand.u32 %s228, 1
        %s423 = scalar_lea.sflag [#allocation6], %s422
        %s424 = sand.u32 %s228, 1
        %s425 = smul.addr %s424, 8
        %s426 = scalar_lea.vmem [#allocation15], %s425
        %p427 = scmp.lt.s32.totalorder %s32, 1
        %s428 = scalar_select %p427, %s32, 1
        %s429 = scalar_lea.vmem %s1, %s428
        %p431 = scmp.eq.s32.totalorder %s33, 0
        // Predicated region
        $region77: #{multi_header_self_attention.1} parent=51 // pred_check
          %p432 = pneg %p431
        $region78: #{multi_header_self_attention.1} parent=51 // pred_check_branch
          %434 = sbr.rel (%p432) target = $region80
        $region79: #{multi_header_self_attention.1} parent=51 // pred_region
          %v435 = vld [vmem:[%s365] sm:$0xff]
          %v436 = vpack.c.bf16 %v435, %v435
          %v437 = vld [vmem:[#allocation9] sm:$0xf]
          %v438 = vld [vmem:[#allocation9 + $0x4] sm:$0xf]
          %v439 = vld [vmem:[#allocation9 + $0x8] sm:$0xf]
          %v440 = vld [vmem:[#allocation9 + $0xc] sm:$0xf]
          %v441 = vld [vmem:[#allocation10] sm:$0x1]
          %v443 = vperm.slane %v441, 0
          %v449 = vunpack.c.l.b16 %v437
          %v450 = vunpack.c.l.b16 %v438
          %v451 = vunpack.c.l.b16 %v439
          %v452 = vunpack.c.l.b16 %v440
          %v453 = vpack.c.b16 %v450, %v449
          %v454 = vpack.c.b16 %v452, %v451
          %vm457 = vcmask 261120
          %v459 = vsel %vm457, %v436, 0
          %461 = vmatpush.bf16.msra.mxu0 0
          %462 = vmatpush.bf16.msra.mxu0 0
          %463 = vmatpush.bf16.msra.mxu0 0
          %464 = vmatpush.bf16.msra.mxu0 0
          %465 = vmatpush.bf16.msra.mxu0 0
          %466 = vmatpush.bf16.msra.mxu0 0
          %467 = vmatpush.bf16.msra.mxu0 %v454
          %468 = vmatpush.bf16.msra.mxu0 %v453
          %469 = vmatmul.bf16.gmra.mxu0 %v459
          %v470 = vpop.f32.mrf.mxu0
          %v471 = vadd.f32 %v443, %v470
          %v472 = vpop.f32.mrf.mxu0
          %473 = vdwg.mxu0
          %v474 = vpack.c.bf16 %v471, %v471
          %vm475 = vcmask 519168
          %476 = vst.msk [vmem:[#allocation2] sm:$0xf] %vm475, %v474
        $region80: #{multi_header_self_attention.1} parent=51 // pred_fallthru
          _
        %s477 = smul.u32 %s33, 8
        %s478 = scalar_lea.vmem %s365, %s477 [#allocation4]
        %v479 = vld [vmem:[%s478] sm:$0xff]
        %v480 = vpack.c.bf16 %v479, %v479
        %v481 = vld [vmem:[#allocation7] sm:$0xf]
        %v482 = vld [vmem:[#allocation7 + $0x4] sm:$0xf]
        %v483 = vld [vmem:[#allocation7 + $0x8] sm:$0xf]
        %v484 = vld [vmem:[#allocation7 + $0xc] sm:$0xf]
        %v485 = vld [vmem:[%s3] sm:$0x1]
        %v487 = vperm.slane %v485, 0
        %v493 = vunpack.c.l.b16 %v481
        %v494 = vunpack.c.l.b16 %v482
        %v495 = vunpack.c.l.b16 %v483
        %v496 = vunpack.c.l.b16 %v484
        %v497 = vpack.c.b16 %v494, %v493
        %v498 = vpack.c.b16 %v496, %v495
        %vm501 = vcmask 261120
        %v503 = vsel %vm501, %v480, 0
        %505 = vmatpush.bf16.msra.mxu0 0
        %506 = vmatpush.bf16.msra.mxu0 0
        %507 = vmatpush.bf16.msra.mxu0 0
        %508 = vmatpush.bf16.msra.mxu0 0
        %509 = vmatpush.bf16.msra.mxu0 0
        %510 = vmatpush.bf16.msra.mxu0 0
        %511 = vmatpush.bf16.msra.mxu0 %v498
        %512 = vmatpush.bf16.msra.mxu0 %v497
        %513 = vmatmul.bf16.gmra.mxu0 %v503
        %v514 = vpop.f32.mrf.mxu0
        %v515 = vadd.f32 %v487, %v514
        %v516 = vpop.f32.mrf.mxu0
        %517 = vdwg.mxu0
        %v518 = vpack.c.bf16 %v515, %v515
        %v519 = vld [vmem:[%s429] sm:$0x1]
        %vm520 = vcmp.eq.s32.totalorder %v519, 0
        %v521 = vsel %vm520, -1e+09, 0.0
        %v523 = vperm.slane %v521, 0
        %v525 = vld [vmem:[#allocation2] sm:$0xf]
        %vm526 = vcmask 64512
        %v528 = vsel %vm526, %v518, 0
        %v531 = vsel %vm526, %v525, 0
        %533 = vmatpush.bf16.xpose.msra.mxu0 0
        %534 = vmatpush.bf16.xpose.msra.mxu0 0
        %535 = vmatpush.bf16.xpose.msra.mxu0 0
        %536 = vmatpush.bf16.xpose.msra.mxu0 0
        %537 = vmatpush.bf16.xpose.msra.mxu0 0
        %538 = vmatpush.bf16.xpose.msra.mxu0 0
        %539 = vmatpush.bf16.xpose.msra.mxu0 0
        %540 = vmatpush.bf16.xpose.msra.mxu0 %v531
        %541 = vmatmul.bf16.gmra.mxu0 %v528
        %v542 = vpop.f32.mrf.mxu0
        %v543 = vadd.f32 %v523, %v542
        %v544 = vpop.f32.mrf.mxu0
        %545 = vdwg.mxu0
        %v546 = vsel %vm526, %v543, -inf
        %547 = vmax.xlane.f32.xlu0 %v546
        %v548 = vpop.xlane.xlu0 %547
        %v549 = vsub.f32 %v543, %v548
        %v550 = vmul.f32 %v549, 1.442695
        %v551 = vpow.pop %v550
        %v552 = vsel %vm526, %v551, 0.0
        %553 = vadd.xlane.f32.xlu0 %v552
        %v554 = vpop.xlane.xlu0 %553
        %v555 = vrcp.pop %v554
        %v556 = vmul.f32 %v551, %v555
        %v557 = vpack.c.bf16 %v556, %v556
        %v559 = vunpack.c.l.b16 %v525
        %v560 = vpack.c.b16 %v559, %v559
        %561 = vrot.lane.b32.xlu0 %v560, 96
        %v562 = vpop.permute.xlu0 %561
        %v564 = vsel %vm526, %v557, 0
        %vm566 = vcmask 1043456
        %v568 = vsel %vm566, %v562, 0
        %570 = vmatpush.bf16.msra.mxu0 0
        %571 = vmatpush.bf16.msra.mxu0 0
        %572 = vmatpush.bf16.msra.mxu0 0
        %573 = vmatpush.bf16.msra.mxu0 0
        %574 = vmatpush.bf16.msra.mxu0 0
        %575 = vmatpush.bf16.msra.mxu0 0
        %576 = vmatpush.bf16.msra.mxu0 0
        %577 = vmatpush.bf16.msra.mxu0 %v568
        %578 = vmatmul.bf16.gmra.mxu0 %v564
        %v579 = vpop.f32.mrf.mxu0
        %v580 = vadd.f32 0.0, %v579
        %v581 = vpop.f32.mrf.mxu0
        %582 = vdwg.mxu0
        %v583 = vpack.c.bf16 %v580, %v580
        %vm584 = vcmask 60416
        %585 = vst.msk [vmem:[#allocation3] sm:$0xf] %vm584, %v583
        %v587 = vunpack.c.l.b16 %v518
        %v588 = vpack.c.b16 %v587, %v587
        %589 = vrot.lane.b32.xlu0 %v588, 120
        %v590 = vpop.permute.xlu0 %589
        %591 = vrot.lane.b32.xlu0 %v560, 120
        %v592 = vpop.permute.xlu0 %591
        %v594 = vsel %vm526, %v590, 0
        %v597 = vsel %vm526, %v592, 0
        %599 = vmatpush.bf16.xpose.msra.mxu0 0
        %600 = vmatpush.bf16.xpose.msra.mxu0 0
        %601 = vmatpush.bf16.xpose.msra.mxu0 0
        %602 = vmatpush.bf16.xpose.msra.mxu0 0
        %603 = vmatpush.bf16.xpose.msra.mxu0 0
        %604 = vmatpush.bf16.xpose.msra.mxu0 0
        %605 = vmatpush.bf16.xpose.msra.mxu0 0
        %606 = vmatpush.bf16.xpose.msra.mxu0 %v597
        %607 = vmatmul.bf16.gmra.mxu0 %v594
        %v608 = vpop.f32.mrf.mxu0
        %v609 = vadd.f32 %v523, %v608
        %v610 = vpop.f32.mrf.mxu0
        %611 = vdwg.mxu0
        %v612 = vsel %vm526, %v609, -inf
        %613 = vmax.xlane.f32.xlu0 %v612
        %v614 = vpop.xlane.xlu0 %613
        %v615 = vsub.f32 %v609, %v614
        %v616 = vmul.f32 %v615, 1.442695
        %v617 = vpow.pop %v616
        %v618 = vsel %vm526, %v617, 0.0
        %619 = vadd.xlane.f32.xlu0 %v618
        %v620 = vpop.xlane.xlu0 %619
        %v621 = vrcp.pop %v620
        %v622 = vmul.f32 %v617, %v621
        %v623 = vpack.c.bf16 %v622, %v622
        %624 = vrot.lane.b32.xlu0 %v560, 88
        %v625 = vpop.permute.xlu0 %624
        %v627 = vsel %vm526, %v623, 0
        %v630 = vsel %vm566, %v625, 0
        %632 = vmatpush.bf16.msra.mxu0 0
        %633 = vmatpush.bf16.msra.mxu0 0
        %634 = vmatpush.bf16.msra.mxu0 0
        %635 = vmatpush.bf16.msra.mxu0 0
        %636 = vmatpush.bf16.msra.mxu0 0
        %637 = vmatpush.bf16.msra.mxu0 0
        %638 = vmatpush.bf16.msra.mxu0 0
        %639 = vmatpush.bf16.msra.mxu0 %v630
        %640 = vmatmul.bf16.gmra.mxu0 %v627
        %v641 = vpop.f32.mrf.mxu0
        %v642 = vadd.f32 0.0, %v641
        %v643 = vpop.f32.mrf.mxu0
        %644 = vdwg.mxu0
        %v645 = vpack.c.bf16 %v642, %v642
        %647 = vrot.lane.b32.xlu0 %v645, 8
        %v648 = vpop.permute.xlu0 %647
        %vm650 = vcmask 126016
        %651 = vst.msk [vmem:[#allocation3] sm:$0xf] %vm650, %v648
        %652 = vrot.lane.b32.xlu0 %v588, 112
        %v653 = vpop.permute.xlu0 %652
        %654 = vrot.lane.b32.xlu0 %v560, 112
        %v655 = vpop.permute.xlu0 %654
        %v657 = vsel %vm526, %v653, 0
        %v660 = vsel %vm526, %v655, 0
        %662 = vmatpush.bf16.xpose.msra.mxu0 0
        %663 = vmatpush.bf16.xpose.msra.mxu0 0
        %664 = vmatpush.bf16.xpose.msra.mxu0 0
        %665 = vmatpush.bf16.xpose.msra.mxu0 0
        %666 = vmatpush.bf16.xpose.msra.mxu0 0
        %667 = vmatpush.bf16.xpose.msra.mxu0 0
        %668 = vmatpush.bf16.xpose.msra.mxu0 0
        %669 = vmatpush.bf16.xpose.msra.mxu0 %v660
        %670 = vmatmul.bf16.gmra.mxu0 %v657
        %v671 = vpop.f32.mrf.mxu0
        %v672 = vadd.f32 %v523, %v671
        %v673 = vpop.f32.mrf.mxu0
        %674 = vdwg.mxu0
        %v675 = vsel %vm526, %v672, -inf
        %676 = vmax.xlane.f32.xlu0 %v675
        %v677 = vpop.xlane.xlu0 %676
        %v678 = vsub.f32 %v672, %v677
        %v679 = vmul.f32 %v678, 1.442695
        %v680 = vpow.pop %v679
        %v681 = vsel %vm526, %v680, 0.0
        %682 = vadd.xlane.f32.xlu0 %v681
        %v683 = vpop.xlane.xlu0 %682
        %v684 = vrcp.pop %v683
        %v685 = vmul.f32 %v680, %v684
        %v686 = vpack.c.bf16 %v685, %v685
        %687 = vrot.lane.b32.xlu0 %v560, 80
        %v688 = vpop.permute.xlu0 %687
        %v690 = vsel %vm526, %v686, 0
        %v693 = vsel %vm566, %v688, 0
        %695 = vmatpush.bf16.msra.mxu0 0
        %696 = vmatpush.bf16.msra.mxu0 0
        %697 = vmatpush.bf16.msra.mxu0 0
        %698 = vmatpush.bf16.msra.mxu0 0
        %699 = vmatpush.bf16.msra.mxu0 0
        %700 = vmatpush.bf16.msra.mxu0 0
        %701 = vmatpush.bf16.msra.mxu0 0
        %702 = vmatpush.bf16.msra.mxu0 %v693
        %703 = vmatmul.bf16.gmra.mxu0 %v690
        %v704 = vpop.f32.mrf.mxu0
        %v705 = vadd.f32 0.0, %v704
        %v706 = vpop.f32.mrf.mxu0
        %707 = vdwg.mxu0
        %v708 = vpack.c.bf16 %v705, %v705
        %710 = vrot.lane.b32.xlu0 %v708, 16
        %v711 = vpop.permute.xlu0 %710
        %vm713 = vcmask 191616
        %714 = vst.msk [vmem:[#allocation3] sm:$0xf] %vm713, %v711
        %715 = vrot.lane.b32.xlu0 %v588, 104
        %v716 = vpop.permute.xlu0 %715
        %717 = vrot.lane.b32.xlu0 %v560, 104
        %v718 = vpop.permute.xlu0 %717
        %v720 = vsel %vm526, %v716, 0
        %v723 = vsel %vm526, %v718, 0
        %725 = vmatpush.bf16.xpose.msra.mxu0 0
        %726 = vmatpush.bf16.xpose.msra.mxu0 0
        %727 = vmatpush.bf16.xpose.msra.mxu0 0
        %728 = vmatpush.bf16.xpose.msra.mxu0 0
        %729 = vmatpush.bf16.xpose.msra.mxu0 0
        %730 = vmatpush.bf16.xpose.msra.mxu0 0
        %731 = vmatpush.bf16.xpose.msra.mxu0 0
        %732 = vmatpush.bf16.xpose.msra.mxu0 %v723
        %733 = vmatmul.bf16.gmra.mxu0 %v720
        %v734 = vpop.f32.mrf.mxu0
        %v735 = vadd.f32 %v523, %v734
        %v736 = vpop.f32.mrf.mxu0
        %737 = vdwg.mxu0
        %v738 = vsel %vm526, %v735, -inf
        %739 = vmax.xlane.f32.xlu0 %v738
        %v740 = vpop.xlane.xlu0 %739
        %v741 = vsub.f32 %v735, %v740
        %v742 = vmul.f32 %v741, 1.442695
        %v743 = vpow.pop %v742
        %v744 = vsel %vm526, %v743, 0.0
        %745 = vadd.xlane.f32.xlu0 %v744
        %v746 = vpop.xlane.xlu0 %745
        %v747 = vrcp.pop %v746
        %v748 = vmul.f32 %v743, %v747
        %v749 = vpack.c.bf16 %v748, %v748
        %750 = vrot.lane.b32.xlu0 %v560, 72
        %v751 = vpop.permute.xlu0 %750
        %v753 = vsel %vm526, %v749, 0
        %v756 = vsel %vm566, %v751, 0
        %758 = vmatpush.bf16.msra.mxu0 0
        %759 = vmatpush.bf16.msra.mxu0 0
        %760 = vmatpush.bf16.msra.mxu0 0
        %761 = vmatpush.bf16.msra.mxu0 0
        %762 = vmatpush.bf16.msra.mxu0 0
        %763 = vmatpush.bf16.msra.mxu0 0
        %764 = vmatpush.bf16.msra.mxu0 0
        %765 = vmatpush.bf16.msra.mxu0 %v756
        %766 = vmatmul.bf16.gmra.mxu0 %v753
        %v767 = vpop.f32.mrf.mxu0
        %v768 = vadd.f32 0.0, %v767
        %v769 = vpop.f32.mrf.mxu0
        %770 = vdwg.mxu0
        %v771 = vpack.c.bf16 %v768, %v768
        %773 = vrot.lane.b32.xlu0 %v771, 24
        %v774 = vpop.permute.xlu0 %773
        %vm776 = vcmask 257216
        %777 = vst.msk [vmem:[#allocation3] sm:$0xf] %vm776, %v774
        %v778 = vld [vmem:[#allocation3] sm:$0xf]
        %v779 = vld [vmem:[#allocation12] sm:$0xf]
        %v780 = vld [vmem:[#allocation12 + $0x4] sm:$0xf]
        %v781 = vld [vmem:[#allocation12 + $0x8] sm:$0xf]
        %v782 = vld [vmem:[#allocation12 + $0xc] sm:$0xf]
        %v783 = vld [vmem:[#allocation13] sm:$0x1]
        %v785 = vperm.slane %v783, 0
        %v791 = vunpack.c.l.b16 %v779
        %v792 = vunpack.c.l.b16 %v780
        %v793 = vunpack.c.l.b16 %v781
        %v794 = vunpack.c.l.b16 %v782
        %v795 = vpack.c.b16 %v792, %v791
        %v796 = vpack.c.b16 %v794, %v793
        %v800 = vsel %vm501, %v778, 0
        %802 = vmatpush.bf16.msra.mxu0 0
        %803 = vmatpush.bf16.msra.mxu0 0
        %804 = vmatpush.bf16.msra.mxu0 0
        %805 = vmatpush.bf16.msra.mxu0 0
        %806 = vmatpush.bf16.msra.mxu0 0
        %807 = vmatpush.bf16.msra.mxu0 0
        %808 = vmatpush.bf16.msra.mxu0 %v796
        %809 = vmatpush.bf16.msra.mxu0 %v795
        %810 = vmatmul.bf16.gmra.mxu0 %v800
        %v811 = vpop.f32.mrf.mxu0
        %v812 = vadd.f32 %v785, %v811
        %v813 = vpop.f32.mrf.mxu0
        %814 = vdwg.mxu0
        %815 = vst.msk [vmem:[%s426] sm:$0xff] %vm501, %v812
        %s816 = sand.u32 %s228, 1
        %s817 = scalar_lea.sflag [#allocation6], %s816
        %s818 = sand.u32 %s228, 1
        %s819 = smul.addr %s818, 8
        %s820 = scalar_lea.vmem [#allocation15], %s819
        // Predicated region
        $region81: #{multi_header_self_attention.1} parent=51 // pred_check
          %p821 = pneg %p238
        $region82: #{multi_header_self_attention.1} parent=51 // pred_check_branch
          %823 = sbr.rel (%p821) target = $region84
        $region83: #{multi_header_self_attention.1} parent=51 // pred_region
          %825 = vsyncadd %s817, 0
          %s826 = sadd.s32 %s33, %s32
          %s827 = smul.addr %s826, 8
          %s828 = scalar_lea.hbm %s8, %s827
          %s830 = sshll.u32 %s820, 4
          %s831 = int_to_ptr.vmem [resolvable:$true] %s830
          %s832 = sshll.u32 %s828, 4
          %s833 = int_to_ptr.hbm [resolvable:$true] %s832
          %835 = dma.vmem_to_hbm [thread:$0]  %s831, 128, %s833, %s817
        $region84: #{multi_header_self_attention.1} parent=51 // pred_fallthru
          _
      $region52: #{multi_header_self_attention.1} parent=5 // pred_fallthru
        _
      %p836 = scmp.le.s32.totalorder 2, %s23
      // Predicated region
      $region85: #{multi_header_self_attention.1} parent=5 // pred_check
        %p837 = pneg %p836
      $region86: #{multi_header_self_attention.1} parent=5 // pred_check_branch
        %839 = sbr.rel (%p837) target = $region88
      $region87: #{multi_header_self_attention.1} parent=5 // pred_region
        %s840 = ssub.s32 %s23, 2
        // Predicated region
        $region89: #{multi_header_self_attention.1} parent=87 // pred_check
          %p841 = pneg %p244
        $region90: #{multi_header_self_attention.1} parent=87 // pred_check_branch
          %843 = sbr.rel (%p841) target = $region92
        $region91: #{multi_header_self_attention.1} parent=87 // pred_region
          %s844 = sand.u32 %s229, 1
          %s845 = scalar_lea.sflag [#allocation6], %s844
          %s846 = sand.u32 %s229, 1
          %s847 = smul.addr %s846, 8
          %s848 = scalar_lea.vmem [#allocation15], %s847
          %850 = dma.done %s845, 128
        $region92: #{multi_header_self_attention.1} parent=87 // pred_fallthru
          _
      $region88: #{multi_header_self_attention.1} parent=5 // pred_fallthru
        _
    $region6: #{multi_header_self_attention.1} parent=1 // loop_footer
      %s27 = sadd.s32 1, %s23
    $region7: #{multi_header_self_attention.1} parent=1 // loop_footer_branch
      %22 = sbr.rel target = $region3
    $region8: #{multi_header_self_attention.1} parent=1 // loop_exit
      _
    %851 = vsyncpa [#allocation5], 1
    %s852 = scalar_lea.sflag [#allocation5], 1
    %853 = vsyncpa %s852, 1
    %854 = vsyncpa [#allocation8], 1
    %855 = vsyncpa [#allocation11], 1
    %856 = vsyncpa [#allocation14], 1
    %857 = vsyncpa [#allocation6], 1
    %s858 = scalar_lea.sflag [#allocation6], 1
    %859 = vsyncpa %s858, 1

</llo_original>
